<compile_context>
chip_gen: v5e
topology: v5e:2x2
jax: 0.10.0
libtpu: 0.0.40
codegen_flags: <defaults>
</compile_context>

<pallas_src>
import functools
import math

import jax
import jax.numpy as jnp
from jax import lax
from jax.experimental import pallas as pl
from jax.experimental.pallas import tpu as pltpu


def _identity(v):
    return v


def _linear_kernel(x_ref, w_ref, b_ref, o_ref, acc_ref, *, activation):
    # x_ref: [tm, tk]   w_ref: [tn, tk] (PyTorch [out, in] layout)
    # b_ref: [1, tn]    o_ref: [tm, tn]  acc_ref: [tm, tn] f32 scratch
    k = pl.program_id(2)

    @pl.when(k == 0)
    def _():
        acc_ref[...] = jnp.zeros_like(acc_ref)

    # x @ W.T without materializing a transposed weight: contract dim 1 of x
    # against dim 1 of W. MXU handles the transposed RHS natively.
    acc_ref[...] += lax.dot_general(
        x_ref[...],
        w_ref[...],
        dimension_numbers=(((1,), (1,)), ((), ())),
        preferred_element_type=jnp.float32,
    )

    @pl.when(k == pl.num_programs(2) - 1)
    def _():
        out = acc_ref[...] + b_ref[...].astype(jnp.float32)
        out = activation(out)
        o_ref[...] = out.astype(o_ref.dtype)


def _round_up(a, b):
    return ((a + b - 1) // b) * b


def linear_pallas(x2d, weight, bias, activation=None,
                  tm_max=512, tn_max=512, tk_max=512):
    """y = activation(x2d @ weight.T + bias), tiled Pallas matmul.

    x2d:    [M, K]
    weight: [N, K]   (PyTorch nn.Linear convention: [out_features, in_features])
    bias:   [N]
    """
    M, K = x2d.shape
    N = weight.shape[0]

    # Tile sizes: lane-dense N/K tiles (multiples of 128), sublane-aligned M.
    tm = min(tm_max, _round_up(M, 8))
    tn = min(tn_max, _round_up(N, 128))
    tk = min(tk_max, _round_up(K, 128))

    Mp, Np, Kp = _round_up(M, tm), _round_up(N, tn), _round_up(K, tk)

    xp = x2d
    if (Mp, Kp) != (M, K):
        xp = jnp.pad(x2d, ((0, Mp - M), (0, Kp - K)))
    wp = weight
    if (Np, Kp) != (N, K):
        wp = jnp.pad(weight, ((0, Np - N), (0, Kp - K)))
    bp = bias.reshape(1, N)
    if Np != N:
        bp = jnp.pad(bp, ((0, 0), (0, Np - N)))

    grid = (Mp // tm, Np // tn, Kp // tk)
    act = activation if activation is not None else _identity
    itemsize = jnp.dtype(x2d.dtype).itemsize

    out = pl.pallas_call(
        functools.partial(_linear_kernel, activation=act),
        out_shape=jax.ShapeDtypeStruct((Mp, Np), x2d.dtype),
        grid_spec=pltpu.PrefetchScalarGridSpec(
            num_scalar_prefetch=0,
            grid=grid,
            in_specs=[
                pl.BlockSpec((tm, tk), lambda i, j, k: (i, k)),   # x tile
                pl.BlockSpec((tn, tk), lambda i, j, k: (j, k)),   # W tile ([out, in])
                pl.BlockSpec((1, tn), lambda i, j, k: (0, j)),    # bias tile
            ],
            out_specs=pl.BlockSpec((tm, tn), lambda i, j, k: (i, j)),
            scratch_shapes=[pltpu.VMEM((tm, tn), jnp.float32)],
        ),
        compiler_params=pltpu.CompilerParams(
            dimension_semantics=("parallel", "parallel", "arbitrary"),
            vmem_limit_bytes=64 * 1024 * 1024,
        ),
        cost_estimate=pl.CostEstimate(
            flops=2 * M * N * K,
            transcendentals=0,
            bytes_accessed=(M * K + N * K + M * N) * itemsize,
        ),
    )(xp, wp, bp)

    if (Mp, Np) != (M, N):
        out = out[:M, :N]
    return out


def mlp_forward(x, w1, b1, w2, b2, act_fn=jax.nn.relu):
    """Matches MLP.forward: w_2(act_fn(w_1(x))).

    x:  [..., d_model]
    w1: [d_hidden, d_model], b1: [d_hidden]
    w2: [d_model, d_hidden], b2: [d_model]
    """
    *lead, d_model = x.shape
    m = 1
    for s in lead:
        m *= s
    x2d = x.reshape(m, d_model)

    # First linear with the activation fused into the kernel epilogue.
    h = linear_pallas(x2d, w1, b1, activation=act_fn)
    # Second linear (no activation).
    y = linear_pallas(h, w2, b2, activation=None)

    return y.reshape(*lead, w2.shape[0])


if __name__ == "__main__":
    # Small, module-consistent, lane-aligned shapes.
    batch, seq, d_model, d_hidden = 2, 8, 128, 256

    key = jax.random.PRNGKey(0)
    k_x, k_w1, k_b1, k_w2, k_b2 = jax.random.split(key, 5)

    # nn.Linear-style init: U(-1/sqrt(in_features), 1/sqrt(in_features))
    bound1 = 1.0 / math.sqrt(d_model)
    w1 = jax.random.uniform(k_w1, (d_hidden, d_model), jnp.float32,
                            minval=-bound1, maxval=bound1)
    b1 = jax.random.uniform(k_b1, (d_hidden,), jnp.float32,
                            minval=-bound1, maxval=bound1)
    bound2 = 1.0 / math.sqrt(d_hidden)
    w2 = jax.random.uniform(k_w2, (d_model, d_hidden), jnp.float32,
                            minval=-bound2, maxval=bound2)
    b2 = jax.random.uniform(k_b2, (d_model,), jnp.float32,
                            minval=-bound2, maxval=bound2)

    x = jax.random.normal(k_x, (batch, seq, d_model), jnp.float32)

    act_fn = jax.nn.relu  # the module takes act_fn as a parameter; ReLU here
    y = mlp_forward(x, w1, b1, w2, b2, act_fn=act_fn)
    y = jax.block_until_ready(y)

    # Pure-JAX reference.
    h_ref = act_fn(x @ w1.T + b1)
    y_ref = h_ref @ w2.T + b2

    assert y.shape == (batch, seq, d_model)
    assert jnp.allclose(y, y_ref, atol=1e-4, rtol=1e-4)

    print("KERNEL_OK")
</pallas_src>

<mosaic_0001>
module attributes {stable_mosaic.version = 11 : i64} {
  func.func @_linear_kernel(%arg0: i32, %arg1: i32, %arg2: i32, %arg3: memref<16x128xf32, #tpu.memory_space<vmem>>, %arg4: memref<256x128xf32, #tpu.memory_space<vmem>>, %arg5: memref<1x256xf32, #tpu.memory_space<vmem>>, %arg6: memref<16x256xf32, #tpu.memory_space<vmem>>, %arg7: memref<16x256xf32, #tpu.memory_space<vmem>>) attributes {dimension_semantics = [#tpu.dimension_semantics<parallel>, #tpu.dimension_semantics<parallel>, #tpu.dimension_semantics<arbitrary>], iteration_bounds = array<i64: 1, 1, 1>, scalar_prefetch = 0 : i64, scratch_operands = 1 : i64, tpu.core_type = #tpu.core_type<tc>, window_params = [{transform_indices = @transform_0, window_bounds = array<i64: 16, 128>}, {transform_indices = @transform_1, window_bounds = array<i64: 256, 128>}, {transform_indices = @transform_2, window_bounds = array<i64: 1, 256>}, {transform_indices = @transform_3, window_bounds = array<i64: 16, 256>}]} {
    %c0_i32 = arith.constant 0 : i32
    %0 = arith.cmpi eq, %arg2, %c0_i32 : i32
    %1 = arith.extui %0 : i1 to i32
    %c0_i32_0 = arith.constant 0 : i32
    %2 = arith.cmpi ne, %1, %c0_i32_0 : i32
    scf.if %2 {
      %cst_10 = arith.constant 0.000000e+00 : f32
      %12 = vector.broadcast %cst_10 : f32 to vector<16x256xf32>
      %c0_11 = arith.constant 0 : index
      %c0_12 = arith.constant 0 : index
      %13 = vector.load %arg7[%c0_11, %c0_12] : memref<16x256xf32, #tpu.memory_space<vmem>>, vector<16x256xf32>
      tpu.vector_store %arg7[%c0_11, %c0_12], %12 {strides = array<i32>} : memref<16x256xf32, #tpu.memory_space<vmem>>, vector<16x256xf32>,
    } else {
    }
    %c0 = arith.constant 0 : index
    %c0_1 = arith.constant 0 : index
    %3 = vector.load %arg7[%c0, %c0_1] : memref<16x256xf32, #tpu.memory_space<vmem>>, vector<16x256xf32>
    %c0_2 = arith.constant 0 : index
    %c0_3 = arith.constant 0 : index
    %4 = vector.load %arg3[%c0_2, %c0_3] : memref<16x128xf32, #tpu.memory_space<vmem>>, vector<16x128xf32>
    %c0_4 = arith.constant 0 : index
    %c0_5 = arith.constant 0 : index
    %5 = vector.load %arg4[%c0_4, %c0_5] : memref<256x128xf32, #tpu.memory_space<vmem>>, vector<256x128xf32>
    %cst = arith.constant dense<0.000000e+00> : vector<16x256xf32>
    %6 = tpu.matmul %4, %5, %cst {dimension_numbers = #tpu.dot_dimension_numbers<[1], [1], [0], [0], [0, 0, 1, 0], [], []>} : vector<16x128xf32>, vector<256x128xf32>, vector<16x256xf32> -> vector<16x256xf32>
    %7 = arith.addf %3, %6 : vector<16x256xf32>
    %c0_6 = arith.constant 0 : index
    %c0_7 = arith.constant 0 : index
    %8 = vector.load %arg7[%c0_6, %c0_7] : memref<16x256xf32, #tpu.memory_space<vmem>>, vector<16x256xf32>
    tpu.vector_store %arg7[%c0_6, %c0_7], %7 {strides = array<i32>} : memref<16x256xf32, #tpu.memory_space<vmem>>, vector<16x256xf32>,
    %c0_i32_8 = arith.constant 0 : i32
    %9 = arith.cmpi eq, %arg2, %c0_i32_8 : i32
    %10 = arith.extui %9 : i1 to i32
    %c0_i32_9 = arith.constant 0 : i32
    %11 = arith.cmpi ne, %10, %c0_i32_9 : i32
    scf.if %11 {
      %c0_10 = arith.constant 0 : index
      %c0_11 = arith.constant 0 : index
      %12 = vector.load %arg7[%c0_10, %c0_11] : memref<16x256xf32, #tpu.memory_space<vmem>>, vector<16x256xf32>
      %c0_12 = arith.constant 0 : index
      %c0_13 = arith.constant 0 : index
      %13 = vector.load %arg5[%c0_12, %c0_13] : memref<1x256xf32, #tpu.memory_space<vmem>>, vector<1x256xf32>
      %14 = vector.broadcast %13 : vector<1x256xf32> to vector<16x256xf32>
      %15 = arith.addf %12, %14 : vector<16x256xf32>
      %cst_14 = arith.constant 0.000000e+00 : f32
      %16 = vector.broadcast %cst_14 : f32 to vector<16x256xf32>
      %17 = arith.maximumf %15, %16 : vector<16x256xf32>
      %c0_15 = arith.constant 0 : index
      %c0_16 = arith.constant 0 : index
      %18 = vector.load %arg6[%c0_15, %c0_16] : memref<16x256xf32, #tpu.memory_space<vmem>>, vector<16x256xf32>
      tpu.vector_store %arg6[%c0_15, %c0_16], %17 {strides = array<i32>} : memref<16x256xf32, #tpu.memory_space<vmem>>, vector<16x256xf32>,
    } else {
    }
    return
  }
  func.func @transform_0(%arg0: i32, %arg1: i32, %arg2: i32) -> (i32, i32) {
    %c0_i32 = arith.constant 0 : i32
    return %arg0, %arg2 : i32, i32
  }
  func.func @transform_1(%arg0: i32, %arg1: i32, %arg2: i32) -> (i32, i32) {
    %c0_i32 = arith.constant 0 : i32
    return %arg1, %arg2 : i32, i32
  }
  func.func @transform_2(%arg0: i32, %arg1: i32, %arg2: i32) -> (i32, i32) {
    %c0_i32 = arith.constant 0 : i32
    %c0_i32_0 = arith.constant 0 : i32
    return %c0_i32, %arg1 : i32, i32
  }
  func.func @transform_3(%arg0: i32, %arg1: i32, %arg2: i32) -> (i32, i32) {
    %c0_i32 = arith.constant 0 : i32
    return %arg0, %arg1 : i32, i32
  }
}

</mosaic_0001>

<llo_original>
// kernel: tpu_custom_call.1
$region0: #{tpu_custom_call.1}
  #allocation0 [shape = 'u32[]', space=smem, size = 0x4, offset = 0x4, fixed_abs, tag = 'smem constant byte address 0x4 - core index']
  #allocation1 [shape = 'u32[72,128]{1,0:T(1,128)}', space=vmem, size = 0x9000, scoped, tag = 'internal scratch']
  #allocation2 [shape = 'f32[16,256]{1,0:T(8,128)}', space=vmem, size = 0x4000, scoped, tag = 'scratch operand']
  %s0 = inlined_call_operand.hbm [shape: f32[16,128], index: 0, kind: input, shape index: {}]
  %s1 = inlined_call_operand.hbm [shape: f32[256,128], index: 1, kind: input, shape index: {}]
  %s2 = inlined_call_operand.hbm [shape: f32[1,256], index: 2, kind: input, shape index: {}]
  %s3 = inlined_call_operand.hbm [shape: f32[16,256], index: 3, kind: output, shape index: {}]
  %s4 = sld [smem:[#allocation0]]
  $region42: #{tpu_custom_call.1} parent=0
    _
  %s6 = ssub.s32 1, %s4
  %s7 = scalar_select 0, %s6, %s4
  $region1: #{tpu_custom_call.1} parent=0
    #allocation3 [shape = 'u8[8192]{0}', space=vmem, size = 0x2000, scoped, tag = 'input window, operand 0, single buffered']
    #allocation4 [shape = 's32[1]{0}', space=sflag, size = 0x4, scoped, tag = 'scoped memory for tpu_custom_call.1']
    #allocation5 [shape = 's32[1]{0}', space=sflag, size = 0x4, scoped, tag = 'scoped memory for tpu_custom_call.1']
    #allocation6 [shape = 'u8[131072]{0}', space=vmem, size = 0x20000, scoped, tag = 'input window, operand 1, single buffered']
    #allocation7 [shape = 's32[1]{0}', space=sflag, size = 0x4, scoped, tag = 'scoped memory for tpu_custom_call.1']
    #allocation8 [shape = 'u8[1024]{0}', space=vmem, size = 0x400, scoped, tag = 'input window, operand 2, single buffered']
    #allocation9 [shape = 'u8[16384]{0}', space=vmem, size = 0x4000, scoped, tag = 'output window, operand 0, single buffered']
    %8 = vsyncpa [#allocation4], 0
    %9 = vsyncpa [#allocation7], 0
    %10 = vsyncpa [#allocation5], 0
    // Predicated region
    $region2: #{tpu_custom_call.1} parent=1 // pred_check
      _
    $region3: #{tpu_custom_call.1} parent=1 // pred_check_branch
      %12 = sbr.rel (0) target = $region5
    $region4: #{tpu_custom_call.1} parent=1 // pred_region
      %14 = vsyncadd [#allocation4], 0
      %s15 = sshll.u32 %s0, 4
      %s16 = int_to_ptr.hbm [resolvable:$true] %s15
      %s17 = sshll.u32 [#allocation3], 4
      %s18 = int_to_ptr.vmem [resolvable:$true] %s17
      %23 = dma.hbm_to_vmem [thread:$0]  %s16, 256, %s18, [#allocation4], 128, 128, 8
    $region5: #{tpu_custom_call.1} parent=1 // pred_fallthru
      _
    // Predicated region
    $region6: #{tpu_custom_call.1} parent=1 // pred_check
      _
    $region7: #{tpu_custom_call.1} parent=1 // pred_check_branch
      %25 = sbr.rel (0) target = $region9
    $region8: #{tpu_custom_call.1} parent=1 // pred_region
      %27 = vsyncadd [#allocation7], 0
      %s28 = sshll.u32 %s1, 4
      %s29 = int_to_ptr.hbm [resolvable:$true] %s28
      %s30 = sshll.u32 [#allocation6], 4
      %s31 = int_to_ptr.vmem [resolvable:$true] %s30
      %36 = dma.hbm_to_vmem [thread:$0]  %s29, 4096, %s31, [#allocation7], 128, 128, 8
    $region9: #{tpu_custom_call.1} parent=1 // pred_fallthru
      _
    // Predicated region
    $region10: #{tpu_custom_call.1} parent=1 // pred_check
      _
    $region11: #{tpu_custom_call.1} parent=1 // pred_check_branch
      %38 = sbr.rel (0) target = $region13
    $region12: #{tpu_custom_call.1} parent=1 // pred_region
      %40 = vsyncadd [#allocation7], 0
      %s42 = sshll.u32 %s2, 4
      %s43 = int_to_ptr.hbm [resolvable:$true] %s42
      %s44 = sshll.u32 [#allocation8], 4
      %s45 = int_to_ptr.vmem [resolvable:$true] %s44
      %47 = dma.hbm_to_vmem [thread:$0]  %s43, 32, %s45, [#allocation7]
    $region13: #{tpu_custom_call.1} parent=1 // pred_fallthru
      _
    // Predicated region
    $region14: #{tpu_custom_call.1} parent=1 // pred_check
      _
    $region15: #{tpu_custom_call.1} parent=1 // pred_check_branch
      %49 = sbr.rel (0) target = $region17
    $region16: #{tpu_custom_call.1} parent=1 // pred_region
      %51 = dma.done [#allocation4], 256
    $region17: #{tpu_custom_call.1} parent=1 // pred_fallthru
      _
    // Predicated region
    $region18: #{tpu_custom_call.1} parent=1 // pred_check
      _
    $region19: #{tpu_custom_call.1} parent=1 // pred_check_branch
      %53 = sbr.rel (0) target = $region21
    $region20: #{tpu_custom_call.1} parent=1 // pred_region
      %55 = dma.done [#allocation7], 4096
    $region21: #{tpu_custom_call.1} parent=1 // pred_fallthru
      _
    // Predicated region
    $region22: #{tpu_custom_call.1} parent=1 // pred_check
      _
    $region23: #{tpu_custom_call.1} parent=1 // pred_check_branch
      %57 = sbr.rel (0) target = $region25
    $region24: #{tpu_custom_call.1} parent=1 // pred_region
      %59 = dma.done [#allocation7], 32
    $region25: #{tpu_custom_call.1} parent=1 // pred_fallthru
      _
    %p60 = scmp.eq.s32.totalorder 0, 0
    // Predicated region
    $region26: #{tpu_custom_call.1} parent=1 // pred_check
      %p61 = pneg %p60
    $region27: #{tpu_custom_call.1} parent=1 // pred_check_branch
      %63 = sbr.rel (%p61) target = $region29
    $region28: #{tpu_custom_call.1} parent=1 // pred_region
      %64 = vst [vmem:[#allocation2] sm:$0xff] 0.0
      %65 = vst [vmem:[#allocation2 + $0x8] sm:$0xff] 0.0
      %66 = vst [vmem:[#allocation2 + $0x10] sm:$0xff] 0.0
      %67 = vst [vmem:[#allocation2 + $0x18] sm:$0xff] 0.0
    $region29: #{tpu_custom_call.1} parent=1 // pred_fallthru
      _
    %v68 = vld [vmem:[#allocation2] sm:$0xff]
    %v69 = vld [vmem:[#allocation2 + $0x8] sm:$0xff]
    %v70 = vld [vmem:[#allocation2 + $0x10] sm:$0xff]
    %v71 = vld [vmem:[#allocation2 + $0x18] sm:$0xff]
    %v72 = vld [vmem:[#allocation3] sm:$0xff]
    %v73 = vld [vmem:[#allocation3 + $0x8] sm:$0xff]
    %v74 = vld [vmem:[#allocation6] sm:$0xff]
    %v75 = vld [vmem:[#allocation6 + $0x8] sm:$0xff]
    %v76 = vld [vmem:[#allocation6 + $0x10] sm:$0xff]
    %v77 = vld [vmem:[#allocation6 + $0x18] sm:$0xff]
    %v78 = vld [vmem:[#allocation6 + $0x20] sm:$0xff]
    %v79 = vld [vmem:[#allocation6 + $0x28] sm:$0xff]
    %v80 = vld [vmem:[#allocation6 + $0x30] sm:$0xff]
    %v81 = vld [vmem:[#allocation6 + $0x38] sm:$0xff]
    %v82 = vld [vmem:[#allocation6 + $0x40] sm:$0xff]
    %v83 = vld [vmem:[#allocation6 + $0x48] sm:$0xff]
    %v84 = vld [vmem:[#allocation6 + $0x50] sm:$0xff]
    %v85 = vld [vmem:[#allocation6 + $0x58] sm:$0xff]
    %v86 = vld [vmem:[#allocation6 + $0x60] sm:$0xff]
    %v87 = vld [vmem:[#allocation6 + $0x68] sm:$0xff]
    %v88 = vld [vmem:[#allocation6 + $0x70] sm:$0xff]
    %v89 = vld [vmem:[#allocation6 + $0x78] sm:$0xff]
    %v90 = vld [vmem:[#allocation6 + $0x80] sm:$0xff]
    %v91 = vld [vmem:[#allocation6 + $0x88] sm:$0xff]
    %v92 = vld [vmem:[#allocation6 + $0x90] sm:$0xff]
    %v93 = vld [vmem:[#allocation6 + $0x98] sm:$0xff]
    %v94 = vld [vmem:[#allocation6 + $0xa0] sm:$0xff]
    %v95 = vld [vmem:[#allocation6 + $0xa8] sm:$0xff]
    %v96 = vld [vmem:[#allocation6 + $0xb0] sm:$0xff]
    %v97 = vld [vmem:[#allocation6 + $0xb8] sm:$0xff]
    %v98 = vld [vmem:[#allocation6 + $0xc0] sm:$0xff]
    %v99 = vld [vmem:[#allocation6 + $0xc8] sm:$0xff]
    %v100 = vld [vmem:[#allocation6 + $0xd0] sm:$0xff]
    %v101 = vld [vmem:[#allocation6 + $0xd8] sm:$0xff]
    %v102 = vld [vmem:[#allocation6 + $0xe0] sm:$0xff]
    %v103 = vld [vmem:[#allocation6 + $0xe8] sm:$0xff]
    %v104 = vld [vmem:[#allocation6 + $0xf0] sm:$0xff]
    %v105 = vld [vmem:[#allocation6 + $0xf8] sm:$0xff]
    %106 = vmatpush.xpose.msra.mxu0 %v89
    %107 = vmatpush.xpose.msra.mxu0 %v88
    %108 = vmatpush.xpose.msra.mxu0 %v87
    %109 = vmatpush.xpose.msra.mxu0 %v86
    %110 = vmatpush.xpose.msra.mxu0 %v85
    %111 = vmatpush.xpose.msra.mxu0 %v84
    %112 = vmatpush.xpose.msra.mxu0 %v83
    %113 = vmatpush.xpose.msra.mxu0 %v82
    %114 = vmatpush.xpose.msra.mxu0 %v81
    %115 = vmatpush.xpose.msra.mxu0 %v80
    %116 = vmatpush.xpose.msra.mxu0 %v79
    %117 = vmatpush.xpose.msra.mxu0 %v78
    %118 = vmatpush.xpose.msra.mxu0 %v77
    %119 = vmatpush.xpose.msra.mxu0 %v76
    %120 = vmatpush.xpose.msra.mxu0 %v75
    %121 = vmatpush.xpose.msra.mxu0 %v74
    %122 = vmatmul.f32.gmra.mxu0 %v72
    %v123 = vpop.f32.mrf.mxu0
    %v124 = vadd.f32 0.0, %v123
    %125 = vmatmul.f32.gmra.mxu0 %v73
    %v126 = vpop.f32.mrf.mxu0
    %v127 = vadd.f32 0.0, %v126
    %128 = vdwg.mxu0
    %129 = vmatpush.xpose.msra.mxu0 %v105
    %130 = vmatpush.xpose.msra.mxu0 %v104
    %131 = vmatpush.xpose.msra.mxu0 %v103
    %132 = vmatpush.xpose.msra.mxu0 %v102
    %133 = vmatpush.xpose.msra.mxu0 %v101
    %134 = vmatpush.xpose.msra.mxu0 %v100
    %135 = vmatpush.xpose.msra.mxu0 %v99
    %136 = vmatpush.xpose.msra.mxu0 %v98
    %137 = vmatpush.xpose.msra.mxu0 %v97
    %138 = vmatpush.xpose.msra.mxu0 %v96
    %139 = vmatpush.xpose.msra.mxu0 %v95
    %140 = vmatpush.xpose.msra.mxu0 %v94
    %141 = vmatpush.xpose.msra.mxu0 %v93
    %142 = vmatpush.xpose.msra.mxu0 %v92
    %143 = vmatpush.xpose.msra.mxu0 %v91
    %144 = vmatpush.xpose.msra.mxu0 %v90
    %145 = vmatmul.f32.gmra.mxu0 %v72
    %v146 = vpop.f32.mrf.mxu0
    %v147 = vadd.f32 0.0, %v146
    %148 = vmatmul.f32.gmra.mxu0 %v73
    %v149 = vpop.f32.mrf.mxu0
    %v150 = vadd.f32 0.0, %v149
    %151 = vdwg.mxu0
    %v152 = vadd.f32 %v68, %v124
    %v153 = vadd.f32 %v69, %v147
    %v154 = vadd.f32 %v70, %v127
    %v155 = vadd.f32 %v71, %v150
    %156 = vst [vmem:[#allocation2] sm:$0xff] %v152
    %157 = vst [vmem:[#allocation2 + $0x8] sm:$0xff] %v153
    %158 = vst [vmem:[#allocation2 + $0x10] sm:$0xff] %v154
    %159 = vst [vmem:[#allocation2 + $0x18] sm:$0xff] %v155
    // Predicated region
    $region30: #{tpu_custom_call.1} parent=1 // pred_check
      %p160 = pneg %p60
    $region31: #{tpu_custom_call.1} parent=1 // pred_check_branch
      %162 = sbr.rel (%p160) target = $region33
    $region32: #{tpu_custom_call.1} parent=1 // pred_region
      %v163 = vld [vmem:[#allocation2] sm:$0xff]
      %v164 = vld [vmem:[#allocation2 + $0x8] sm:$0xff]
      %v165 = vld [vmem:[#allocation2 + $0x10] sm:$0xff]
      %v166 = vld [vmem:[#allocation2 + $0x18] sm:$0xff]
      %v167 = vld [vmem:[#allocation8] sm:$0x3]
      %v169 = vperm.slane %v167, 0
      %v170 = vperm.slane %v167, 1
      %v173 = vadd.f32 %v163, %v169
      %v174 = vadd.f32 %v164, %v170
      %v175 = vadd.f32 %v165, %v169
      %v176 = vadd.f32 %v166, %v170
      %v177 = vmax.f32 %v173, 0.0
      %v178 = vmax.f32 %v174, 0.0
      %v179 = vmax.f32 %v175, 0.0
      %v180 = vmax.f32 %v176, 0.0
      %181 = vst [vmem:[#allocation9] sm:$0xff] %v177
      %182 = vst [vmem:[#allocation9 + $0x8] sm:$0xff] %v178
      %183 = vst [vmem:[#allocation9 + $0x10] sm:$0xff] %v179
      %184 = vst [vmem:[#allocation9 + $0x18] sm:$0xff] %v180
    $region33: #{tpu_custom_call.1} parent=1 // pred_fallthru
      _
    // Predicated region
    $region34: #{tpu_custom_call.1} parent=1 // pred_check
      _
    $region35: #{tpu_custom_call.1} parent=1 // pred_check_branch
      %186 = sbr.rel (0) target = $region37
    $region36: #{tpu_custom_call.1} parent=1 // pred_region
      %188 = vsyncadd [#allocation5], 0
      %s189 = sshll.u32 [#allocation9], 4
      %s190 = int_to_ptr.vmem [resolvable:$true] %s189
      %s191 = sshll.u32 %s3, 4
      %s192 = int_to_ptr.hbm [resolvable:$true] %s191
      %197 = dma.vmem_to_hbm [thread:$0]  %s190, 512, %s192, [#allocation5], 256, 256, 16
    $region37: #{tpu_custom_call.1} parent=1 // pred_fallthru
      _
    // Predicated region
    $region38: #{tpu_custom_call.1} parent=1 // pred_check
      _
    $region39: #{tpu_custom_call.1} parent=1 // pred_check_branch
      %199 = sbr.rel (0) target = $region41
    $region40: #{tpu_custom_call.1} parent=1 // pred_region
      %201 = dma.done [#allocation5], 512
    $region41: #{tpu_custom_call.1} parent=1 // pred_fallthru
      _
    %202 = vsyncpa [#allocation4], 1
    %203 = vsyncpa [#allocation7], 1
    %204 = vsyncpa [#allocation5], 1

</llo_original>
